<compile_context>
chip_gen: v7x
topology: tpu7x:2x2x1
jax: 0.10.0
libtpu: 0.0.40
codegen_flags: <defaults>
</compile_context>

<pallas_src>
import math

import jax
import jax.numpy as jnp
from jax.experimental import pallas as pl
from jax.experimental.pallas import tpu as pltpu


def make_positional_encoding_table(max_len, d_model, dtype=jnp.float32):
    """Deterministic 'parameter' pe, identical to the PyTorch __init__."""
    position = jnp.arange(max_len, dtype=jnp.float32)[:, None]          # [L, 1]
    div_term = jnp.exp(
        jnp.arange(0, d_model, 2, dtype=jnp.float32)
        * (-math.log(10000.0) / d_model)
    )                                                                   # [D/2]
    pe = jnp.zeros((max_len, d_model), dtype=jnp.float32)
    pe = pe.at[:, 0::2].set(jnp.sin(position * div_term))
    pe = pe.at[:, 1::2].set(jnp.cos(position * div_term))
    # pe.unsqueeze(0).transpose(0, 1) -> [max_len, 1, d_model]
    return pe[:, None, :].astype(dtype)


def _vmem_capacity_bytes():
    """Physical VMEM of the local chip (128 MiB v5e/v6e, 64 MiB per-TC v7x)."""
    try:
        return int(pltpu.get_tpu_info().vmem_capacity_bytes)
    except Exception:
        return 64 << 20          # conservative (v7x-sized) fallback


def _pick_fold(seq_len, width):
    """Smallest k dividing seq_len with (k * width) % 128 == 0 (1 if none).

    Folding k sequence rows into the lane axis makes the 2-D view's last dim a
    multiple of 128 lanes -> unmasked stores even when B*D is small."""
    k0 = 128 // math.gcd(width, 128)
    if k0 == 1:
        return 1
    k = k0
    while k <= seq_len:
        if seq_len % k == 0:
            return k
        k += k0
    return 1      # no divisor found: fall back to masked boundary stores


def _pick_tile_rows(n_rows, bytes_per_row, vmem_cap):
    """Rows per grid step, sized purely by bytes (no artificial row cap).

    bytes_per_row counts every double-buffered stream (x + out + pe).  Target
    live footprint is half of physical VMEM, capped at 64 MiB, which amortizes
    the ~0.35 us per-grid-step overhead on every generation while leaving
    headroom under the explicit vmem_limit_bytes below."""
    total_budget = min(vmem_cap // 2, 64 << 20)
    ts = total_budget // (2 * max(bytes_per_row, 1))      # 2 = double buffer
    if ts >= n_rows:
        return n_rows
    return max(8, (ts // 8) * 8)                          # 8-sublane multiple


def _dim_semantics(n_blocks):
    """CORE_PARALLEL on v7x (2 TensorCores/chip); 'arbitrary' elsewhere."""
    try:
        kind = jax.devices()[0].device_kind.lower()
    except Exception:
        kind = ""
    if ("v7" in kind or "tpu7" in kind) and n_blocks >= 2 and n_blocks % 2 == 0:
        return (pltpu.CORE_PARALLEL,)
    return ("arbitrary",)


def _make_kernel(batch_copies, p, train):
    keep_scale = 1.0 / (1.0 - p) if p < 1.0 else 0.0
    drop_threshold = min(int(round(p * (1 << 32))), (1 << 32) - 1)

    def _compute(x_ref, pe_ref, o_ref, seed_ref):
        x = x_ref[...]                                    # [TS, C], x.dtype
        pe = pe_ref[...]                                  # already x.dtype
        if batch_copies > 1:
            # Only used when D % 128 == 0: lane-aligned vreg copies (cheap),
            # keeps pe HBM traffic at S*D instead of S*B*D.
            pe = jnp.concatenate([pe] * batch_copies, axis=-1)
        y = x + pe
        if train and p > 0.0:
            # Inverted dropout: per-tile seed, uint32 threshold compare; the
            # keep-scale multiply happens in f32 to avoid bf16 scale bias.
            pltpu.prng_seed(seed_ref[0] + pl.program_id(0))
            bits = pltpu.bitcast(pltpu.prng_random_bits(y.shape), jnp.uint32)
            keep = bits >= jnp.uint32(drop_threshold)     # P(keep) = 1 - p
            y32 = y.astype(jnp.float32) * jnp.float32(keep_scale)
            y = jnp.where(keep, y32, jnp.zeros_like(y32))
        o_ref[...] = y.astype(o_ref.dtype)

    if train and p > 0.0:
        def kernel(seed_ref, x_ref, pe_ref, o_ref):
            _compute(x_ref, pe_ref, o_ref, seed_ref)
    else:
        def kernel(x_ref, pe_ref, o_ref):
            _compute(x_ref, pe_ref, o_ref, None)
    return kernel


def positional_encoding(x, pe, *, p=0.1, train=False, seed=0,
                        tile_rows=None, donate_x=False):
    """out = dropout(x + pe[:S]).

    x : [S, B, D]   (sequence, batch, embed) — same layout as the PyTorch module
    pe: [max_len, 1, D] (the module's parameter) or [max_len, D]
    donate_x: alias x's buffer to the output (only if the caller is done with x).
    """
    S, B, D = x.shape
    pe2 = pe.reshape(pe.shape[0], pe.shape[-1]) if pe.ndim == 3 else pe
    max_len, d_pe = pe2.shape
    assert d_pe == D, "pe embed dim mismatch"
    assert max_len >= S, "sequence longer than positional table"
    pe2 = pe2.astype(x.dtype)            # cast once here, not per tile

    itemsize = x.dtype.itemsize
    in_kernel_bcast = (D % 128 == 0)

    if in_kernel_bcast:
        # Lane-aligned embed dim (real denoiser case, d_model % 128 == 0):
        # x view is already lane dense; pe stays the small [max_len, D] table
        # indexed through the BlockSpec (no slice copy, no batch duplication).
        n_rows, width = S, B * D
        x_v = x.reshape(n_rows, width)                   # free row-major view
        pe_arr = pe2
        pe_cols = D
    else:
        # General case: pre-broadcast pe over batch so the kernel is a pure
        # elementwise add, then fold `fold` sequence rows into the lane axis
        # so tiles are lane dense (last dim multiple of 128).
        fold = _pick_fold(S, B * D)
        n_rows, width = S // fold, fold * B * D
        x_v = x.reshape(n_rows, width)                   # free row-major view
        pe_arr = jnp.broadcast_to(pe2[:S, None, :], (S, B, D)).reshape(n_rows, width)
        pe_cols = width

    bytes_per_row = (2 * width + pe_cols) * itemsize     # x + out + pe per row
    vmem_cap = _vmem_capacity_bytes()
    if tile_rows is None:
        ts = _pick_tile_rows(n_rows, bytes_per_row, vmem_cap)
    else:
        ts = min(int(tile_rows), n_rows)
        if ts < n_rows:
            ts = max(8, (ts // 8) * 8)
    n_blocks = pl.cdiv(n_rows, ts)

    if in_kernel_bcast and n_blocks * ts > max_len:
        # Rare (tight table): keep the padded last grid block inside the pe
        # array.  Costs a one-off S*D-byte slice copy only when triggered.
        pe_arr = pe_arr[:S]

    kernel = _make_kernel(B if in_kernel_bcast else 1, float(p), bool(train))

    in_specs = [
        pl.BlockSpec((ts, width), lambda i: (i, 0)),      # x tiles
        pl.BlockSpec((ts, pe_cols), lambda i: (i, 0)),    # pe tiles
    ]
    args = [x_v, pe_arr]
    x_arg_idx = 0
    if train and p > 0.0:
        in_specs = [pl.BlockSpec(memory_space=pltpu.MemorySpace.SMEM)] + in_specs
        args = [jnp.asarray([seed], dtype=jnp.int32)] + args
        x_arg_idx = 1

    n_elems = S * B * D
    pe_read_bytes = (S * D if in_kernel_bcast else S * B * D) * itemsize
    cost = pl.CostEstimate(
        flops=n_elems,
        transcendentals=0,
        bytes_accessed=2 * n_elems * itemsize + pe_read_bytes,
    )

    # Explicit scoped-VMEM limit sized from the real double-buffered footprint:
    # above v5e's 16 MiB default, comfortably inside v7x's 64 MiB physical.
    footprint = 2 * ts * bytes_per_row
    vmem_limit = min(max(footprint + (8 << 20), 32 << 20), vmem_cap * 3 // 4)

    compiler_params = pltpu.CompilerParams(
        dimension_semantics=_dim_semantics(n_blocks),
        vmem_limit_bytes=int(vmem_limit),
    )

    out_v = pl.pallas_call(
        kernel,
        out_shape=jax.ShapeDtypeStruct((n_rows, width), x.dtype),
        grid=(n_blocks,),
        in_specs=in_specs,
        out_specs=pl.BlockSpec((ts, width), lambda i: (i, 0)),
        compiler_params=compiler_params,
        input_output_aliases={x_arg_idx: 0} if donate_x else {},
        cost_estimate=cost,
    )(*args)
    return out_v.reshape(S, B, D)


if __name__ == "__main__":
    # [seq, batch, d_model] — same layout as the PyTorch module's forward.
    S, B, D = 8, 2, 32
    MAX_LEN = 64

    x = jax.random.normal(jax.random.PRNGKey(0), (S, B, D), dtype=jnp.float32)
    pe = make_positional_encoding_table(MAX_LEN, D)

    # Eval mode (dropout == identity, matching nn.Dropout().eval()).
    out = jax.block_until_ready(positional_encoding(x, pe, p=0.1, train=False))
    ref = x + pe[:S]
    assert out.shape == (S, B, D)
    assert jnp.allclose(out, ref, atol=1e-6, rtol=1e-6), "mismatch vs reference"

    # Multi-block path (grid > 1) on the folded, lane-dense view.
    S2 = 32
    x2 = jax.random.normal(jax.random.PRNGKey(1), (S2, B, D), dtype=jnp.float32)
    ref2 = jax.block_until_ready(x2 + pe[:S2])
    out2 = jax.block_until_ready(
        positional_encoding(x2, pe, p=0.1, train=False, tile_rows=8))
    assert out2.shape == (S2, B, D)
    assert jnp.allclose(out2, ref2, atol=1e-6, rtol=1e-6), "tiled mismatch"

    # Donated-input path (input_output_aliases); x2 is not used afterwards.
    out2d = jax.block_until_ready(
        positional_encoding(x2, pe, p=0.1, train=False, tile_rows=8, donate_x=True))
    assert jnp.allclose(out2d, ref2, atol=1e-6, rtol=1e-6), "donated mismatch"

    # Lane-aligned embed dim (D % 128 == 0): pe stays the small [max_len, D]
    # table and is broadcast in-kernel with aligned vreg copies.
    D3, S3 = 128, 16
    pe3 = make_positional_encoding_table(MAX_LEN, D3)
    x3 = jax.random.normal(jax.random.PRNGKey(2), (S3, B, D3), dtype=jnp.float32)
    ref3 = x3 + pe3[:S3]
    out3 = jax.block_until_ready(
        positional_encoding(x3, pe3, p=0.1, train=False, tile_rows=8))
    assert jnp.allclose(out3, ref3, atol=1e-6, rtol=1e-6), "aligned-D mismatch"

    # bf16 activations: pe is cast once in the wrapper; compute stays bf16.
    x_bf = x.astype(jnp.bfloat16)
    ref_bf = x_bf + pe[:S].astype(jnp.bfloat16)
    out_bf = jax.block_until_ready(positional_encoding(x_bf, pe, p=0.1, train=False))
    assert jnp.allclose(out_bf.astype(jnp.float32), ref_bf.astype(jnp.float32),
                        atol=1e-2, rtol=1e-2), "bf16 mismatch"

    # NOTE: train-mode dropout (pltpu.prng_seed / prng_random_bits) is
    # implemented above and lowers on real TPU hardware; the TPU PRNG has no
    # CPU-interpreter rule, so the demo sticks to eval mode.
    print("KERNEL_OK")
</pallas_src>

<mosaic_0001>
module attributes {stable_mosaic.version = 11 : i64} {
  func.func @kernel(%arg0: i32, %arg1: memref<4x128xf32, #tpu.memory_space<vmem>>, %arg2: memref<4x128xf32, #tpu.memory_space<vmem>>, %arg3: memref<4x128xf32, #tpu.memory_space<vmem>>) attributes {dimension_semantics = [#tpu.dimension_semantics<arbitrary>], iteration_bounds = array<i64: 1>, scalar_prefetch = 0 : i64, scratch_operands = 0 : i64, tpu.core_type = #tpu.core_type<tc>, window_params = [{transform_indices = @transform_0, window_bounds = array<i64: 4, 128>}, {transform_indices = @transform_1, window_bounds = array<i64: 4, 128>}, {transform_indices = @transform_2, window_bounds = array<i64: 4, 128>}]} {
    %c0 = arith.constant 0 : index
    %c0_0 = arith.constant 0 : index
    %0 = vector.load %arg1[%c0, %c0_0] : memref<4x128xf32, #tpu.memory_space<vmem>>, vector<4x128xf32>
    %c0_1 = arith.constant 0 : index
    %c0_2 = arith.constant 0 : index
    %1 = vector.load %arg2[%c0_1, %c0_2] : memref<4x128xf32, #tpu.memory_space<vmem>>, vector<4x128xf32>
    %2 = arith.addf %0, %1 : vector<4x128xf32>
    %c0_3 = arith.constant 0 : index
    %c0_4 = arith.constant 0 : index
    %3 = vector.load %arg3[%c0_3, %c0_4] : memref<4x128xf32, #tpu.memory_space<vmem>>, vector<4x128xf32>
    tpu.vector_store %arg3[%c0_3, %c0_4], %2 {strides = array<i32>} : memref<4x128xf32, #tpu.memory_space<vmem>>, vector<4x128xf32>,
    return
  }
  func.func @transform_0(%arg0: i32) -> (i32, i32) {
    %c0_i32 = arith.constant 0 : i32
    %c0_i32_0 = arith.constant 0 : i32
    return %arg0, %c0_i32 : i32, i32
  }
  func.func @transform_1(%arg0: i32) -> (i32, i32) {
    %c0_i32 = arith.constant 0 : i32
    %c0_i32_0 = arith.constant 0 : i32
    return %arg0, %c0_i32 : i32, i32
  }
  func.func @transform_2(%arg0: i32) -> (i32, i32) {
    %c0_i32 = arith.constant 0 : i32
    %c0_i32_0 = arith.constant 0 : i32
    return %arg0, %c0_i32 : i32, i32
  }
}

</mosaic_0001>

<llo_original>
// kernel: tpu_custom_call.1
$region0: #{tpu_custom_call.1}
  #allocation0 [shape = 'u32[]', space=smem, size = 0x4, offset = 0x4, fixed_abs, tag = 'smem constant byte address 0x4 - core index']
  #allocation1 [shape = 'u32[144,128]{1,0:T(1,128)}', space=vmem, size = 0x12000, scoped, tag = 'internal scratch']
  %s0 = inlined_call_operand.hbm [shape: f32[4,128], index: 0, kind: input, shape index: {}]
  %s1 = inlined_call_operand.hbm [shape: f32[4,128], index: 1, kind: input, shape index: {}]
  %s2 = inlined_call_operand.hbm [shape: f32[4,128], index: 2, kind: output, shape index: {}]
  %s3 = sld [smem:[#allocation0]]
  $region26: #{tpu_custom_call.1} parent=0
    _
  %s5 = ssub.s32 1, %s3
  %s6 = scalar_select 0, %s5, %s3
  $region1: #{tpu_custom_call.1} parent=0
    #allocation2 [shape = 'u8[2048]{0}', space=vmem, size = 0x800, scoped, tag = 'input window, operand 0, single buffered']
    #allocation3 [shape = 's32[1]{0}', space=sflag, size = 0x4, scoped, tag = 'scoped memory for tpu_custom_call.1']
    #allocation4 [shape = 's32[1]{0}', space=sflag, size = 0x4, scoped, tag = 'scoped memory for tpu_custom_call.1']
    #allocation5 [shape = 'u8[2048]{0}', space=vmem, size = 0x800, scoped, tag = 'input window, operand 1, single buffered']
    #allocation6 [shape = 's32[1]{0}', space=sflag, size = 0x4, scoped, tag = 'scoped memory for tpu_custom_call.1']
    #allocation7 [shape = 'u8[2048]{0}', space=vmem, size = 0x800, scoped, tag = 'output window, operand 0, single buffered']
    %7 = vsyncpa [#allocation3], 0
    %8 = vsyncpa [#allocation6], 0
    %9 = vsyncpa [#allocation4], 0
    // Predicated region
    $region2: #{tpu_custom_call.1} parent=1 // pred_check
      _
    $region3: #{tpu_custom_call.1} parent=1 // pred_check_branch
      %11 = sbr.rel (0) target = $region5
    $region4: #{tpu_custom_call.1} parent=1 // pred_region
      %s13 = ssub.s32 64, 64
      %14 = vsyncadd [#allocation3], %s13
      %s16 = sshll.u32 [#allocation2], 4
      %s17 = int_to_ptr.vmem [resolvable:$true] %s16
      %19 = dma.hbm_to_vmem [thread:$0]  %s0, 64, %s17, [#allocation3]
    $region5: #{tpu_custom_call.1} parent=1 // pred_fallthru
      _
    // Predicated region
    $region6: #{tpu_custom_call.1} parent=1 // pred_check
      _
    $region7: #{tpu_custom_call.1} parent=1 // pred_check_branch
      %21 = sbr.rel (0) target = $region9
    $region8: #{tpu_custom_call.1} parent=1 // pred_region
      %s23 = ssub.s32 64, 64
      %24 = vsyncadd [#allocation6], %s23
      %s26 = sshll.u32 [#allocation5], 4
      %s27 = int_to_ptr.vmem [resolvable:$true] %s26
      %29 = dma.hbm_to_vmem [thread:$0]  %s1, 64, %s27, [#allocation6]
    $region9: #{tpu_custom_call.1} parent=1 // pred_fallthru
      _
    // Predicated region
    $region10: #{tpu_custom_call.1} parent=1 // pred_check
      _
    $region11: #{tpu_custom_call.1} parent=1 // pred_check_branch
      %31 = sbr.rel (0) target = $region13
    $region12: #{tpu_custom_call.1} parent=1 // pred_region
      %32 = dma.done [#allocation3], 64
    $region13: #{tpu_custom_call.1} parent=1 // pred_fallthru
      _
    // Predicated region
    $region14: #{tpu_custom_call.1} parent=1 // pred_check
      _
    $region15: #{tpu_custom_call.1} parent=1 // pred_check_branch
      %34 = sbr.rel (0) target = $region17
    $region16: #{tpu_custom_call.1} parent=1 // pred_region
      %35 = dma.done [#allocation6], 64
    $region17: #{tpu_custom_call.1} parent=1 // pred_fallthru
      _
    %v36 = vld [vmem:[#allocation2] sm:$0xf]
    %v37 = vld [vmem:[#allocation5] sm:$0xf]
    %v38 = vadd.f32 %v36, %v37
    %39 = vst [vmem:[#allocation7] sm:$0xf] %v38
    // Predicated region
    $region18: #{tpu_custom_call.1} parent=1 // pred_check
      _
    $region19: #{tpu_custom_call.1} parent=1 // pred_check_branch
      %41 = sbr.rel (0) target = $region21
    $region20: #{tpu_custom_call.1} parent=1 // pred_region
      %s43 = ssub.s32 64, 64
      %44 = vsyncadd [#allocation4], %s43
      %s46 = sshll.u32 [#allocation7], 4
      %s47 = int_to_ptr.vmem [resolvable:$true] %s46
      %49 = dma.vmem_to_hbm [thread:$0]  %s47, 64, %s2, [#allocation4]
    $region21: #{tpu_custom_call.1} parent=1 // pred_fallthru
      _
    // Predicated region
    $region22: #{tpu_custom_call.1} parent=1 // pred_check
      _
    $region23: #{tpu_custom_call.1} parent=1 // pred_check_branch
      %51 = sbr.rel (0) target = $region25
    $region24: #{tpu_custom_call.1} parent=1 // pred_region
      %52 = dma.done [#allocation4], 64
    $region25: #{tpu_custom_call.1} parent=1 // pred_fallthru
      _
    %53 = vsyncpa [#allocation3], 1
    %54 = vsyncpa [#allocation6], 1
    %55 = vsyncpa [#allocation4], 1

</llo_original>
